<compile_context>
chip_gen: v7x
topology: tpu7x:2x2x1
jax: 0.10.0
libtpu: 0.0.40
codegen_flags: <defaults>
</compile_context>

<pallas_src>
import jax
import jax.numpy as jnp
import numpy as np
from jax.experimental import pallas as pl
from jax.experimental.pallas import tpu as pltpu

_MIB = 1 << 20


# ------------------------------- kernels ------------------------------------

def _binlayer_tiled_kernel(xi_ref, xj_ref, pqr_ref, o_ref):
    """Pair-grid tile: out[b,i,j] = P*x_i*x_j + Q*(x_i + x_j) + R.

    xi_ref : (TB, TI)    f32  i-side slice of x
    xj_ref : (TB, n)     f32  full j-side row of x
    pqr_ref: (3, TI, n)  bf16 coefficient planes (VMEM-resident across b steps)
    o_ref  : (TB, TI, n) bf16 output tile
    """
    xi = xi_ref[...]
    xj = xj_ref[...]
    # f32 compute on all generations; bf16 only at the store.
    p = pqr_ref[0].astype(jnp.float32)
    q = pqr_ref[1].astype(jnp.float32)
    r = pqr_ref[2].astype(jnp.float32)

    # NOTE: xi has TI on lanes but broadcasts across the output lane axis ->
    # Mosaic inserts an XLU splat/relayout; at TB*TI elems/step this is cheap
    # filler in a different VLIW slot than the VALU / vst path.
    xi_b = xi[:, :, None]              # (TB, TI, 1)
    xj_b = xj[:, None, :]              # (TB, 1, n)
    out = p[None] * (xi_b * xj_b) + q[None] * (xi_b + xj_b) + r[None]
    o_ref[...] = out.astype(o_ref.dtype)


def _binlayer_flat_kernel(xi_ref, xj_ref, pqr_ref, o_ref):
    """Lane-dense variant for small n: the (i, j) pair axis is pre-flattened.

    xi_ref : (TB, L) f32  x[b, k // n]
    xj_ref : (TB, L) f32  x[b, k %  n]
    pqr_ref: (3, L)  bf16
    o_ref  : (TB, L) bf16
    """
    xi = xi_ref[...]
    xj = xj_ref[...]
    p = pqr_ref[0:1, :].astype(jnp.float32)
    q = pqr_ref[1:2, :].astype(jnp.float32)
    r = pqr_ref[2:3, :].astype(jnp.float32)
    out = p * (xi * xj) + q * (xi + xj) + r
    o_ref[...] = out.astype(o_ref.dtype)


# --------------------------- sizing heuristics -------------------------------

def _vmem_budget():
    """Return (tile_budget_bytes, vmem_limit_bytes), generation-aware."""
    cap = None
    try:
        cap = int(pltpu.get_tpu_info().vmem_capacity_bytes)
    except Exception:
        cap = None
    if cap is None or cap <= 64 * _MIB:
        # v7x-class (64 MiB physical) or unknown: leave headroom for Mosaic
        # internal scratch / semaphores so double-buffering stays intact.
        return 32 * _MIB, 48 * _MIB
    # v5e / v6e: 128 MiB physical, only 16/32 MiB scoped default -> raise it.
    return 80 * _MIB, 104 * _MIB


def _choose_tiles_tiled(B, n, budget):
    """Pick (TB, TI) for the 3-D path; prefer the largest output block."""

    def usage(tb, ti):
        out_b = 2 * tb * ti * n * 2          # bf16 output block, double-buffered
        coef_b = 2 * 3 * ti * n * 2          # bf16 P/Q/R block, double-buffered
        x_b = 2 * (tb * ti + tb * n) * 4     # i-side + j-side x blocks (f32)
        tmp_b = tb * ti * n * 4              # headroom for f32 compute temps
        return out_b + coef_b + x_b + tmp_b

    ti_cands = [n] + [t for t in (2048, 1024, 512, 256, 128) if t < n and n % t == 0]
    if B >= 8:
        tb_cands = [t for t in (1024, 512, 256, 128, 64, 32, 16, 8) if t <= B]
    else:
        tb_cands = [B]

    best = None
    for ti in ti_cands:
        for tb in tb_cands:
            if usage(tb, ti) <= budget:
                score = (tb * ti, ti)
                if best is None or score > best[0]:
                    best = (score, (tb, ti))
                break                         # largest fitting tb for this ti
    if best is None:
        return tb_cands[-1], ti_cands[-1]
    return best[1]


def _choose_tb_flat(B, L, budget):
    def usage(tb):
        return (2 * tb * L * 2            # bf16 output
                + 2 * 2 * tb * L * 4      # two f32 expanded inputs
                + 2 * 3 * L * 2           # bf16 coefficients
                + tb * L * 4)             # f32 compute headroom
    if B < 8:
        return B
    for tb in (1024, 512, 256, 128, 64, 32, 16, 8):
        if tb <= B and usage(tb) <= budget:
            return tb
    return 8


# ------------------------------- wrappers ------------------------------------

def _forward_tiled(x_f, pqr, B, n, budget, vmem_limit, out_dtype):
    TB, TI = _choose_tiles_tiled(B, n, budget)
    n_it = n // TI
    n_b = pl.cdiv(B, TB)

    # Megacore balance: tiny odd step counts split unevenly across 2 TCs.
    # Redistribute the same work over an even number of steps (no extra HBM).
    if (n_it * n_b) % 2 == 1 and n_it * n_b <= 7 and TB >= 16:
        TB //= 2
        n_b = pl.cdiv(B, TB)

    Bp = n_b * TB
    if Bp != B:
        x_f = jnp.pad(x_f, ((0, Bp - B), (0, 0)))   # padded rows give R; sliced off

    out_isz = np.dtype(out_dtype).itemsize
    cost = pl.CostEstimate(
        flops=6 * Bp * n * n,
        transcendentals=0,
        bytes_accessed=Bp * n * n * out_isz + 3 * n * n * 2 + 2 * Bp * n * 4,
    )

    out_bnn = pl.pallas_call(
        _binlayer_tiled_kernel,
        out_shape=jax.ShapeDtypeStruct((Bp, n, n), out_dtype),
        # Batch is the INNERMOST grid axis so the (3, TI, n) coefficient block
        # (index_map independent of b) stays VMEM-resident across batch steps.
        grid=(n_it, n_b),
        in_specs=[
            pl.BlockSpec((TB, TI), lambda it, b: (b, it)),        # x, i-side slice
            pl.BlockSpec((TB, n), lambda it, b: (b, 0)),          # x, j-side full row
            pl.BlockSpec((3, TI, n), lambda it, b: (0, it, 0)),   # P/Q/R planes
        ],
        out_specs=pl.BlockSpec((TB, TI, n), lambda it, b: (b, it, 0)),
        compiler_params=pltpu.CompilerParams(
            dimension_semantics=("parallel", "parallel"),
            vmem_limit_bytes=vmem_limit,
        ),
        cost_estimate=cost,
    )(x_f, x_f, pqr)

    # Matches PyTorch .view(B, -1): k = i*n + j (row-major). Free reshape.
    return out_bnn[:B].reshape(B, n * n)


def _forward_flat(x_f, pqr_flat, B, n, budget, vmem_limit, out_dtype):
    L = n * n
    # Lane-dense path (n < 128 or n not a 128-multiple): flatten the (i, j)
    # pair axis in the wrapper so the output last dim is L, not n.
    xi_rep = jnp.repeat(x_f, n, axis=1)      # (B, L): x[b, k // n]
    xj_rep = jnp.tile(x_f, (1, n))           # (B, L): x[b, k %  n]

    TB = _choose_tb_flat(B, L, budget)
    n_b = pl.cdiv(B, TB)
    Bp = n_b * TB
    if Bp != B:
        pad = ((0, Bp - B), (0, 0))
        xi_rep = jnp.pad(xi_rep, pad)
        xj_rep = jnp.pad(xj_rep, pad)

    out_isz = np.dtype(out_dtype).itemsize
    cost = pl.CostEstimate(
        flops=6 * Bp * L,
        transcendentals=0,
        bytes_accessed=Bp * L * (out_isz + 8) + 3 * L * 2,
    )

    out = pl.pallas_call(
        _binlayer_flat_kernel,
        out_shape=jax.ShapeDtypeStruct((Bp, L), out_dtype),
        grid=(n_b,),
        in_specs=[
            pl.BlockSpec((TB, L), lambda b: (b, 0)),
            pl.BlockSpec((TB, L), lambda b: (b, 0)),
            pl.BlockSpec((3, L), lambda b: (0, 0)),   # resident across batch steps
        ],
        out_specs=pl.BlockSpec((TB, L), lambda b: (b, 0)),
        compiler_params=pltpu.CompilerParams(
            dimension_semantics=("parallel",),
            vmem_limit_bytes=vmem_limit,
        ),
        cost_estimate=cost,
    )(xi_rep, xj_rep, pqr_flat)

    return out[:B]


def binlayer_forward(x, weights, temp=0.01, out_dtype=jnp.bfloat16):
    """x: (B, n) float in {-1,+1}; weights: (n*n, 3) float (cols: and, or, xor)."""
    B, n = x.shape
    assert weights.shape == (n * n, 3)
    x_f = x.astype(jnp.float32)

    # Batch-independent precompute (softmax hoisted out of the kernel), f32.
    sw = jax.nn.softmax(weights.astype(jnp.float32) / temp, axis=-1)   # (n*n, 3)
    p = 0.5 * (sw[:, 0] - sw[:, 1]) - sw[:, 2]
    q = 0.5 * (sw[:, 0] + sw[:, 1])
    r = 0.5 * (sw[:, 1] - sw[:, 0])
    # bf16 coefficient planes: half the VMEM footprint + HBM read traffic;
    # temp=0.01 softmax is near one-hot so the precision loss is negligible.
    pqr_flat = jnp.stack([p, q, r], axis=0).astype(jnp.bfloat16)       # (3, n*n)

    budget, vmem_limit = _vmem_budget()

    if n % 128 == 0:
        return _forward_tiled(x_f, pqr_flat.reshape(3, n, n), B, n,
                              budget, vmem_limit, out_dtype)
    return _forward_flat(x_f, pqr_flat, B, n, budget, vmem_limit, out_dtype)


# ------------------------------ reference ------------------------------------

def _reference_numpy(x, weights, temp):
    x = np.asarray(x, dtype=np.float32)
    w = np.asarray(weights, dtype=np.float32)
    B, n = x.shape
    xor = (-(x[:, :, None] * x[:, None, :])).reshape(B, -1)
    x01 = (x + 1.0) / 2.0
    and_ = (2.0 * (x01[:, :, None] * x01[:, None, :]) - 1.0).reshape(B, -1)
    or_ = xor + and_ + 1.0
    wl = w / temp
    e = np.exp(wl - wl.max(axis=-1, keepdims=True))
    sw = e / e.sum(axis=-1, keepdims=True)             # (n*n, 3)
    stacked = np.stack([and_, or_, xor], axis=-1)      # (B, n*n, 3)
    return (stacked * sw[None]).sum(axis=-1)


if __name__ == "__main__":
    temp = 0.01
    key = jax.random.PRNGKey(0)

    # --- small-n path (n < 128 -> flattened lane-dense output) ---
    B, n = 2, 8
    kx, kw, key = jax.random.split(key, 3)
    x = jax.random.bernoulli(kx, 0.5, (B, n)).astype(jnp.float32) * 2.0 - 1.0
    weights = jax.random.uniform(kw, (n * n, 3), jnp.float32, minval=-1.0, maxval=1.0)
    out = jax.block_until_ready(binlayer_forward(x, weights, temp=temp))
    assert out.shape == (B, n * n)
    np.testing.assert_allclose(np.asarray(out).astype(np.float32),
                               _reference_numpy(x, weights, temp),
                               rtol=3e-2, atol=3e-2)

    # --- tiled path (n % 128 == 0 -> 3-D blocks, batch-innermost grid) ---
    B2, n2 = 4, 128
    kx2, kw2, key = jax.random.split(key, 3)
    x2 = jax.random.bernoulli(kx2, 0.5, (B2, n2)).astype(jnp.float32) * 2.0 - 1.0
    weights2 = jax.random.uniform(kw2, (n2 * n2, 3), jnp.float32,
                                  minval=-1.0, maxval=1.0)
    out2 = jax.block_until_ready(binlayer_forward(x2, weights2, temp=temp))
    assert out2.shape == (B2, n2 * n2)
    np.testing.assert_allclose(np.asarray(out2).astype(np.float32),
                               _reference_numpy(x2, weights2, temp),
                               rtol=3e-2, atol=3e-2)

    print("KERNEL_OK")
</pallas_src>

<mosaic_0001>
module attributes {stable_mosaic.version = 11 : i64} {
  func.func @_binlayer_flat_kernel(%arg0: i32, %arg1: memref<2x64xf32, #tpu.memory_space<vmem>>, %arg2: memref<2x64xf32, #tpu.memory_space<vmem>>, %arg3: memref<3x64xbf16, #tpu.memory_space<vmem>>, %arg4: memref<2x64xbf16, #tpu.memory_space<vmem>>) attributes {dimension_semantics = [#tpu.dimension_semantics<parallel>], iteration_bounds = array<i64: 1>, scalar_prefetch = 0 : i64, scratch_operands = 0 : i64, tpu.core_type = #tpu.core_type<tc>, window_params = [{transform_indices = @transform_0, window_bounds = array<i64: 2, 64>}, {transform_indices = @transform_1, window_bounds = array<i64: 2, 64>}, {pipeline_mode = #tpu.pipeline_mode<synchronous>, transform_indices = @transform_2, window_bounds = array<i64: 3, 64>}, {transform_indices = @transform_3, window_bounds = array<i64: 2, 64>}]} {
    %c0 = arith.constant 0 : index
    %c0_0 = arith.constant 0 : index
    %0 = vector.load %arg1[%c0, %c0_0] : memref<2x64xf32, #tpu.memory_space<vmem>>, vector<2x64xf32>
    %c0_1 = arith.constant 0 : index
    %c0_2 = arith.constant 0 : index
    %1 = vector.load %arg2[%c0_1, %c0_2] : memref<2x64xf32, #tpu.memory_space<vmem>>, vector<2x64xf32>
    %c0_3 = arith.constant 0 : index
    %c0_4 = arith.constant 0 : index
    %2 = vector.load %arg3[%c0_3, %c0_4] : memref<3x64xbf16, #tpu.memory_space<vmem>>, vector<1x64xbf16>
    %3 = arith.extf %2 : vector<1x64xbf16> to vector<1x64xf32>
    %c1 = arith.constant 1 : index
    %c0_5 = arith.constant 0 : index
    %4 = vector.load %arg3[%c1, %c0_5] : memref<3x64xbf16, #tpu.memory_space<vmem>>, vector<1x64xbf16>
    %5 = arith.extf %4 : vector<1x64xbf16> to vector<1x64xf32>
    %c2 = arith.constant 2 : index
    %c0_6 = arith.constant 0 : index
    %6 = vector.load %arg3[%c2, %c0_6] : memref<3x64xbf16, #tpu.memory_space<vmem>>, vector<1x64xbf16>
    %7 = arith.extf %6 : vector<1x64xbf16> to vector<1x64xf32>
    %8 = arith.mulf %0, %1 : vector<2x64xf32>
    %9 = vector.broadcast %3 : vector<1x64xf32> to vector<2x64xf32>
    %10 = arith.mulf %9, %8 : vector<2x64xf32>
    %11 = arith.addf %0, %1 : vector<2x64xf32>
    %12 = vector.broadcast %5 : vector<1x64xf32> to vector<2x64xf32>
    %13 = arith.mulf %12, %11 : vector<2x64xf32>
    %14 = arith.addf %10, %13 : vector<2x64xf32>
    %15 = vector.broadcast %7 : vector<1x64xf32> to vector<2x64xf32>
    %16 = arith.addf %14, %15 : vector<2x64xf32>
    %17 = arith.truncf %16 : vector<2x64xf32> to vector<2x64xbf16>
    %c0_7 = arith.constant 0 : index
    %c0_8 = arith.constant 0 : index
    %18 = vector.load %arg4[%c0_7, %c0_8] : memref<2x64xbf16, #tpu.memory_space<vmem>>, vector<2x64xbf16>
    tpu.vector_store %arg4[%c0_7, %c0_8], %17 {strides = array<i32>} : memref<2x64xbf16, #tpu.memory_space<vmem>>, vector<2x64xbf16>,
    return
  }
  func.func @transform_0(%arg0: i32) -> (i32, i32) {
    %c0_i32 = arith.constant 0 : i32
    %c0_i32_0 = arith.constant 0 : i32
    return %arg0, %c0_i32 : i32, i32
  }
  func.func @transform_1(%arg0: i32) -> (i32, i32) {
    %c0_i32 = arith.constant 0 : i32
    %c0_i32_0 = arith.constant 0 : i32
    return %arg0, %c0_i32 : i32, i32
  }
  func.func @transform_2(%arg0: i32) -> (i32, i32) {
    %c0_i32 = arith.constant 0 : i32
    %c0_i32_0 = arith.constant 0 : i32
    %c0_i32_1 = arith.constant 0 : i32
    return %c0_i32, %c0_i32_0 : i32, i32
  }
  func.func @transform_3(%arg0: i32) -> (i32, i32) {
    %c0_i32 = arith.constant 0 : i32
    %c0_i32_0 = arith.constant 0 : i32
    return %arg0, %c0_i32 : i32, i32
  }
}

</mosaic_0001>

<llo_original>
// kernel: tpu_custom_call.1
$region0: #{tpu_custom_call.1}
  #allocation0 [shape = 'u32[]', space=smem, size = 0x4, offset = 0x4, fixed_abs, tag = 'smem constant byte address 0x4 - core index']
  #allocation1 [shape = 'u32[144,128]{1,0:T(1,128)}', space=vmem, size = 0x12000, scoped, tag = 'internal scratch']
  %s0 = inlined_call_operand.hbm [shape: f32[2,64], index: 0, kind: input, shape index: {}]
  %s1 = inlined_call_operand.vmem [shape: f32[2,64], index: 1, kind: input, shape index: {}]
  %s2 = inlined_call_operand.vmem [shape: bf16[3,64], index: 2, kind: input, shape index: {}]
  %s3 = inlined_call_operand.hbm [shape: bf16[2,64], index: 3, kind: output, shape index: {}]
  %s4 = sld [smem:[#allocation0]]
  $region26: #{tpu_custom_call.1} parent=0
    _
  %s6 = ssub.s32 1, %s4
  %s7 = scalar_select 0, %s6, %s4
  $region1: #{tpu_custom_call.1} parent=0
    #allocation2 [shape = 'u8[1024]{0}', space=vmem, size = 0x400, scoped, tag = 'input window, operand 0, single buffered']
    #allocation3 [shape = 's32[1]{0}', space=sflag, size = 0x4, scoped, tag = 'scoped memory for tpu_custom_call.1']
    #allocation4 [shape = 's32[1]{0}', space=sflag, size = 0x4, scoped, tag = 'scoped memory for tpu_custom_call.1']
    #allocation5 [shape = 'u8[512]{0}', space=vmem, size = 0x400, scoped, tag = 'output window, operand 0, single buffered']
    %8 = vsyncpa [#allocation3], 0
    %9 = vsyncpa [#allocation4], 0
    // Predicated region
    $region2: #{tpu_custom_call.1} parent=1 // pred_check
      _
    $region3: #{tpu_custom_call.1} parent=1 // pred_check_branch
      %11 = sbr.rel (0) target = $region5
    $region4: #{tpu_custom_call.1} parent=1 // pred_region
      %s13 = ssub.s32 32, 32
      %14 = vsyncadd [#allocation3], %s13
      %s16 = sshll.u32 [#allocation2], 4
      %s17 = int_to_ptr.vmem [resolvable:$true] %s16
      %19 = dma.hbm_to_vmem [thread:$0]  %s0, 32, %s17, [#allocation3]
    $region5: #{tpu_custom_call.1} parent=1 // pred_fallthru
      _
    // Predicated region
    $region6: #{tpu_custom_call.1} parent=1 // pred_check
      _
    $region7: #{tpu_custom_call.1} parent=1 // pred_check_branch
      %21 = sbr.rel (0) target = $region9
    $region8: #{tpu_custom_call.1} parent=1 // pred_region
      _
    $region9: #{tpu_custom_call.1} parent=1 // pred_fallthru
      _
    // Predicated region
    $region10: #{tpu_custom_call.1} parent=1 // pred_check
      _
    $region11: #{tpu_custom_call.1} parent=1 // pred_check_branch
      %23 = sbr.rel (0) target = $region13
    $region12: #{tpu_custom_call.1} parent=1 // pred_region
      _
    $region13: #{tpu_custom_call.1} parent=1 // pred_fallthru
      _
    // Predicated region
    $region14: #{tpu_custom_call.1} parent=1 // pred_check
      _
    $region15: #{tpu_custom_call.1} parent=1 // pred_check_branch
      %25 = sbr.rel (0) target = $region17
    $region16: #{tpu_custom_call.1} parent=1 // pred_region
      %26 = dma.done [#allocation3], 32
    $region17: #{tpu_custom_call.1} parent=1 // pred_fallthru
      _
    %v27 = vld [vmem:[#allocation2] sm:$0x3]
    %v28 = vld [vmem:[%s1] sm:$0x3]
    %v29 = vld [vmem:[%s2] sm:$0x1]
    %v30 = vunpack.c.l.bf16 %v29
    %v31 = vld [vmem:[%s2] sm:$0x2]
    %v32 = vunpack.c.l.bf16 %v31
    %v33 = vmul.f32 %v27, %v28
    %v34 = vlaneseq
    %v35 = vshrl.u32 %v34, 7
    %v36 = vsub.s32 0, %v35
    %v37 = vrot.slane %v30, %v36
    %v38 = vmul.f32 %v37, %v33
    %v39 = vadd.f32 %v27, %v28
    %v40 = vlaneseq
    %v41 = vshrl.u32 %v40, 7
    %v42 = vsub.s32 1, %v41
    %v43 = vrot.slane %v30, %v42
    %v44 = vmul.f32 %v43, %v39
    %v45 = vadd.f32 %v38, %v44
    %v46 = vlaneseq
    %v47 = vshrl.u32 %v46, 7
    %v48 = vsub.s32 2, %v47
    %v49 = vrot.slane %v32, %v48
    %v50 = vadd.f32 %v45, %v49
    %v51 = vpack.c.bf16 %v50, %v50
    %vm52 = vcmask 516096
    %53 = vst.msk [vmem:[#allocation5] sm:$0x1] %vm52, %v51
    // Predicated region
    $region18: #{tpu_custom_call.1} parent=1 // pred_check
      _
    $region19: #{tpu_custom_call.1} parent=1 // pred_check_branch
      %55 = sbr.rel (0) target = $region21
    $region20: #{tpu_custom_call.1} parent=1 // pred_region
      %s57 = ssub.s32 16, 16
      %58 = vsyncadd [#allocation4], %s57
      %s60 = sshll.u32 [#allocation5], 4
      %s61 = int_to_ptr.vmem [resolvable:$true] %s60
      %63 = dma.vmem_to_hbm [thread:$0]  %s61, 16, %s3, [#allocation4]
    $region21: #{tpu_custom_call.1} parent=1 // pred_fallthru
      _
    // Predicated region
    $region22: #{tpu_custom_call.1} parent=1 // pred_check
      _
    $region23: #{tpu_custom_call.1} parent=1 // pred_check_branch
      %65 = sbr.rel (0) target = $region25
    $region24: #{tpu_custom_call.1} parent=1 // pred_region
      %66 = dma.done [#allocation4], 16
    $region25: #{tpu_custom_call.1} parent=1 // pred_fallthru
      _
    %67 = vsyncpa [#allocation3], 1
    %68 = vsyncpa [#allocation4], 1

</llo_original>
